<compile_context>
chip_gen: v7x
topology: tpu7x:2x2x1
jax: 0.10.0
libtpu: 0.0.40
codegen_flags: <defaults>
</compile_context>

<pallas_src>
import functools

import jax
import jax.numpy as jnp
from jax.experimental import pallas as pl
from jax.experimental.pallas import tpu as pltpu

LANES = 128
SUBLANES = 8


def _round_up(x, m):
    return (x + m - 1) // m * m


# --------------------------- ND path: (N, C, L) ----------------------------

def _bce_nd_kernel(x_ref, t_ref, out_ref, *, n_cols, block_cols):
    j = pl.program_id(1)

    @pl.when(j == 0)
    def _():
        out_ref[...] = jnp.zeros_like(out_ref)

    x = x_ref[...].astype(jnp.float32)          # (1, C, block_cols)
    t = t_ref[...]                              # (1, 1, block_cols) int32

    # Numerically stable log-softmax over the class (sublane) axis.
    m = jnp.max(x, axis=1, keepdims=True)       # (1, 1, block_cols)
    sh = x - m
    lse = jnp.log(jnp.sum(jnp.exp(sh), axis=1, keepdims=True))
    # Gather shifted logit at the target class via a one-hot select (lane-wise).
    cls = jax.lax.broadcasted_iota(jnp.int32, x.shape, 1)
    sh_t = jnp.sum(jnp.where(cls == t, sh, 0.0), axis=1, keepdims=True)
    loss = lse - sh_t                           # per-sample NLL, (1, 1, block_cols)

    if n_cols % block_cols != 0:
        # Static condition: only emitted when the last lane block is ragged.
        lane = jax.lax.broadcasted_iota(jnp.int32, loss.shape, 2) + j * block_cols
        loss = jnp.where(lane < n_cols, loss, 0.0)

    out_ref[...] += loss


def _bce_total_nd(x3, t3, tile_bytes):
    B, C, L = (int(s) for s in x3.shape)
    cap = max(LANES, (tile_bytes // (C * x3.dtype.itemsize)) // LANES * LANES)
    block_cols = min(cap, _round_up(L, LANES))

    kernel = functools.partial(_bce_nd_kernel, n_cols=L, block_cols=block_cols)

    partial_sums = pl.pallas_call(
        kernel,
        out_shape=jax.ShapeDtypeStruct((B, 1, block_cols), jnp.float32),
        grid_spec=pltpu.PrefetchScalarGridSpec(
            num_scalar_prefetch=0,
            grid=(B, pl.cdiv(L, block_cols)),
            in_specs=[
                pl.BlockSpec((1, C, block_cols), lambda b, j: (b, 0, j)),
                pl.BlockSpec((1, 1, block_cols), lambda b, j: (b, 0, j)),
            ],
            out_specs=pl.BlockSpec((1, 1, block_cols), lambda b, j: (b, 0, 0)),
        ),
        compiler_params=pltpu.CompilerParams(
            dimension_semantics=("parallel", "arbitrary"),
        ),
    )(x3, t3)

    return jnp.sum(partial_sums)


# ----------------------------- 2-D path: (M, C) ----------------------------

def _bce_2d_kernel(x_ref, t_ref, out_ref):
    x = x_ref[...].astype(jnp.float32)          # (R, C)
    t = t_ref[...]                              # (R, 1) int32
    m = jnp.max(x, axis=1, keepdims=True)       # (R, 1)
    sh = x - m
    lse = jnp.log(jnp.sum(jnp.exp(sh), axis=1, keepdims=True))
    cls = jax.lax.broadcasted_iota(jnp.int32, x.shape, 1)
    sh_t = jnp.sum(jnp.where(cls == t, sh, 0.0), axis=1, keepdims=True)
    out_ref[...] = lse - sh_t                   # per-sample NLL, (R, 1)


def _bce_total_2d(x2, t2, tile_bytes):
    M, C = int(x2.shape[0]), int(x2.shape[1])
    cap = max(SUBLANES,
              (tile_bytes // (C * x2.dtype.itemsize)) // SUBLANES * SUBLANES)
    block_rows = min(cap, _round_up(M, SUBLANES))

    per_sample = pl.pallas_call(
        _bce_2d_kernel,
        out_shape=jax.ShapeDtypeStruct((M, 1), jnp.float32),
        grid_spec=pltpu.PrefetchScalarGridSpec(
            num_scalar_prefetch=0,
            grid=(pl.cdiv(M, block_rows),),
            in_specs=[
                pl.BlockSpec((block_rows, C), lambda i: (i, 0)),
                pl.BlockSpec((block_rows, 1), lambda i: (i, 0)),
            ],
            out_specs=pl.BlockSpec((block_rows, 1), lambda i: (i, 0)),
        ),
        compiler_params=pltpu.CompilerParams(
            dimension_semantics=("parallel",),
        ),
    )(x2, t2)

    return jnp.sum(per_sample)


# --------------------------------- wrapper ----------------------------------

def bce_loss(inputs, target, size_average=True, tile_bytes=1 << 20):
    """Pallas TPU implementation of BCELoss.forward(input, target)."""
    if inputs.ndim > 2:
        N, C = int(inputs.shape[0]), int(inputs.shape[1])
        L = 1
        for s in inputs.shape[2:]:
            L *= int(s)
        x3 = inputs.reshape(N, C, L)                       # free, contiguous reshape
        t3 = target.reshape(N, 1, L).astype(jnp.int32)     # free reshape
        total = _bce_total_nd(x3, t3, tile_bytes)
        n_samples = N * L
    else:
        M, C = int(inputs.shape[0]), int(inputs.shape[1])
        t2 = target.reshape(M, 1).astype(jnp.int32)
        total = _bce_total_2d(inputs, t2, tile_bytes)
        n_samples = M
    return total / n_samples if size_average else total


def bce_loss_ref(inputs, target, size_average=True):
    """Pure-JAX reference mirroring the PyTorch module exactly."""
    if inputs.ndim > 2:
        N, C = inputs.shape[0], inputs.shape[1]
        x = inputs.reshape(N, C, -1)
        x = jnp.transpose(x, (0, 2, 1)).reshape(-1, C)
    else:
        x = inputs
    t = target.reshape(-1).astype(jnp.int32)
    logp = jax.nn.log_softmax(x.astype(jnp.float32), axis=1)
    lp_t = jnp.take_along_axis(logp, t[:, None], axis=1)[:, 0]
    loss = -lp_t
    return jnp.mean(loss) if size_average else jnp.sum(loss)


if __name__ == "__main__":
    key = jax.random.PRNGKey(0)
    k1, k2, k3, k4, k5, k6 = jax.random.split(key, 6)

    # 4-D per-pixel classification head, lane-aligned spatial size.
    B, C, H, W = 2, 4, 16, 16
    logits = jax.random.normal(k1, (B, C, H, W), jnp.float32)
    target = jax.random.randint(k2, (B, H, W), 0, C, dtype=jnp.int32)
    loss = jax.block_until_ready(bce_loss(logits, target))
    ref = bce_loss_ref(logits, target)
    assert jnp.allclose(loss, ref, rtol=1e-5, atol=1e-5), (loss, ref)
    loss_s = jax.block_until_ready(bce_loss(logits, target, size_average=False))
    ref_s = bce_loss_ref(logits, target, size_average=False)
    assert jnp.allclose(loss_s, ref_s, rtol=1e-5, atol=1e-5), (loss_s, ref_s)

    # 4-D with a ragged spatial size (exercises the lane-tail masking path).
    Hr = Wr = 15
    logits_r = jax.random.normal(k3, (B, C, Hr, Wr), jnp.float32)
    target_r = jax.random.randint(k4, (B, Hr, Wr), 0, C, dtype=jnp.int32)
    loss_r = jax.block_until_ready(bce_loss(logits_r, target_r))
    ref_r = bce_loss_ref(logits_r, target_r)
    assert jnp.allclose(loss_r, ref_r, rtol=1e-5, atol=1e-5), (loss_r, ref_r)

    # 2-D samples-by-classes input.
    M, C2 = 64, 10
    logits2 = jax.random.normal(k5, (M, C2), jnp.float32)
    target2 = jax.random.randint(k6, (M,), 0, C2, dtype=jnp.int32)
    loss2 = jax.block_until_ready(bce_loss(logits2, target2))
    ref2 = bce_loss_ref(logits2, target2)
    assert jnp.allclose(loss2, ref2, rtol=1e-5, atol=1e-5), (loss2, ref2)

    print("KERNEL_OK")
</pallas_src>

<mosaic_0001>
module attributes {stable_mosaic.version = 11 : i64} {
  func.func @_bce_nd_kernel(%arg0: i32, %arg1: i32, %arg2: memref<1x4x256xf32, #tpu.memory_space<vmem>>, %arg3: memref<1x1x256xi32, #tpu.memory_space<vmem>>, %arg4: memref<1x1x256xf32, #tpu.memory_space<vmem>>) attributes {dimension_semantics = [#tpu.dimension_semantics<parallel>, #tpu.dimension_semantics<arbitrary>], iteration_bounds = array<i64: 2, 1>, scalar_prefetch = 0 : i64, scratch_operands = 0 : i64, tpu.core_type = #tpu.core_type<tc>, window_params = [{transform_indices = @transform_0, window_bounds = array<i64: 1, 4, 256>}, {transform_indices = @transform_1, window_bounds = array<i64: 1, 1, 256>}, {transform_indices = @transform_2, window_bounds = array<i64: 1, 1, 256>}]} {
    %c0_i32 = arith.constant 0 : i32
    %0 = arith.cmpi eq, %arg1, %c0_i32 : i32
    %1 = arith.extui %0 : i1 to i32
    %c0_i32_0 = arith.constant 0 : i32
    %2 = arith.cmpi ne, %1, %c0_i32_0 : i32
    scf.if %2 {
      %cst_15 = arith.constant 0.000000e+00 : f32
      %24 = vector.broadcast %cst_15 : f32 to vector<1x1x256xf32>
      %c0_16 = arith.constant 0 : index
      %c0_17 = arith.constant 0 : index
      %c0_18 = arith.constant 0 : index
      %25 = vector.load %arg4[%c0_16, %c0_17, %c0_18] : memref<1x1x256xf32, #tpu.memory_space<vmem>>, vector<1x1x256xf32>
      tpu.vector_store %arg4[%c0_16, %c0_17, %c0_18], %24 {strides = array<i32>} : memref<1x1x256xf32, #tpu.memory_space<vmem>>, vector<1x1x256xf32>,
    } else {
    }
    %c0 = arith.constant 0 : index
    %c0_1 = arith.constant 0 : index
    %c0_2 = arith.constant 0 : index
    %3 = vector.load %arg2[%c0, %c0_1, %c0_2] : memref<1x4x256xf32, #tpu.memory_space<vmem>>, vector<1x4x256xf32>
    %c0_3 = arith.constant 0 : index
    %c0_4 = arith.constant 0 : index
    %c0_5 = arith.constant 0 : index
    %4 = vector.load %arg3[%c0_3, %c0_4, %c0_5] : memref<1x1x256xi32, #tpu.memory_space<vmem>>, vector<1x1x256xi32>
    %cst = arith.constant dense<0xFF800000> : vector<1x256xf32>
    %5 = vector.multi_reduction <maximumf>, %3, %cst [1] : vector<1x4x256xf32> to vector<1x256xf32>
    %6 = vector.shape_cast %5 : vector<1x256xf32> to vector<1x1x256xf32>
    %7 = vector.broadcast %6 : vector<1x1x256xf32> to vector<1x4x256xf32>
    %8 = arith.subf %3, %7 : vector<1x4x256xf32>
    %9 = math.exp %8 : vector<1x4x256xf32>
    %cst_6 = arith.constant dense<0.000000e+00> : vector<1x256xf32>
    %10 = vector.multi_reduction <add>, %9, %cst_6 [1] : vector<1x4x256xf32> to vector<1x256xf32>
    %11 = vector.shape_cast %10 : vector<1x256xf32> to vector<1x1x256xf32>
    %12 = math.log %11 : vector<1x1x256xf32>
    %13 = tpu.iota {dimensions = array<i32: 1>} : vector<1x4x256xi32>
    %14 = vector.broadcast %4 : vector<1x1x256xi32> to vector<1x4x256xi32>
    %15 = arith.cmpi eq, %13, %14 : vector<1x4x256xi32>
    %cst_7 = arith.constant 0.000000e+00 : f32
    %16 = vector.broadcast %cst_7 : f32 to vector<1x4x256xf32>
    %17 = arith.select %15, %8, %16 : vector<1x4x256xi1>, vector<1x4x256xf32>
    %cst_8 = arith.constant dense<0.000000e+00> : vector<1x256xf32>
    %18 = vector.multi_reduction <add>, %17, %cst_8 [1] : vector<1x4x256xf32> to vector<1x256xf32>
    %19 = vector.shape_cast %18 : vector<1x256xf32> to vector<1x1x256xf32>
    %20 = arith.subf %12, %19 : vector<1x1x256xf32>
    %c0_9 = arith.constant 0 : index
    %c0_10 = arith.constant 0 : index
    %c0_11 = arith.constant 0 : index
    %21 = vector.load %arg4[%c0_9, %c0_10, %c0_11] : memref<1x1x256xf32, #tpu.memory_space<vmem>>, vector<1x1x256xf32>
    %22 = arith.addf %21, %20 : vector<1x1x256xf32>
    %c0_12 = arith.constant 0 : index
    %c0_13 = arith.constant 0 : index
    %c0_14 = arith.constant 0 : index
    %23 = vector.load %arg4[%c0_12, %c0_13, %c0_14] : memref<1x1x256xf32, #tpu.memory_space<vmem>>, vector<1x1x256xf32>
    tpu.vector_store %arg4[%c0_12, %c0_13, %c0_14], %22 {strides = array<i32>} : memref<1x1x256xf32, #tpu.memory_space<vmem>>, vector<1x1x256xf32>,
    return
  }
  func.func @transform_0(%arg0: i32, %arg1: i32) -> (i32, i32, i32) {
    %c0_i32 = arith.constant 0 : i32
    %c0_i32_0 = arith.constant 0 : i32
    return %arg0, %c0_i32, %arg1 : i32, i32, i32
  }
  func.func @transform_1(%arg0: i32, %arg1: i32) -> (i32, i32, i32) {
    %c0_i32 = arith.constant 0 : i32
    %c0_i32_0 = arith.constant 0 : i32
    return %arg0, %c0_i32, %arg1 : i32, i32, i32
  }
  func.func @transform_2(%arg0: i32, %arg1: i32) -> (i32, i32, i32) {
    %c0_i32 = arith.constant 0 : i32
    %c0_i32_0 = arith.constant 0 : i32
    %c0_i32_1 = arith.constant 0 : i32
    return %arg0, %c0_i32, %c0_i32_0 : i32, i32, i32
  }
}

</mosaic_0001>

<llo_original>
// kernel: tpu_custom_call.1
$region0: #{tpu_custom_call.1}
  #allocation0 [shape = 'u32[]', space=smem, size = 0x4, offset = 0x4, fixed_abs, tag = 'smem constant byte address 0x4 - core index']
  #allocation1 [shape = 'u32[144,128]{1,0:T(1,128)}', space=vmem, size = 0x12000, scoped, tag = 'internal scratch']
  %s0 = inlined_call_operand.hbm [shape: f32[2,4,256], index: 0, kind: input, shape index: {}]
  %s1 = inlined_call_operand.hbm [shape: s32[2,1,256], index: 1, kind: input, shape index: {}]
  %s2 = inlined_call_operand.hbm [shape: f32[2,1,256], index: 2, kind: output, shape index: {}]
  %s3 = sld [smem:[#allocation0]]
  $region53: #{tpu_custom_call.1} parent=0
    _
  %s5 = ssub.s32 1, %s3
  %s6 = scalar_select 0, %s5, %s3
  $region1: #{tpu_custom_call.1} parent=0
    #allocation2 [shape = 'u8[8192]{0}', space=vmem, size = 0x2000, scoped, tag = 'input window, operand 0']
    #allocation3 [shape = 's32[2]{0}', space=sflag, size = 0x8, scoped, tag = 'scoped memory for tpu_custom_call.1']
    #allocation4 [shape = 's32[2]{0}', space=sflag, size = 0x8, scoped, tag = 'scoped memory for tpu_custom_call.1']
    #allocation5 [shape = 'u8[2048]{0}', space=vmem, size = 0x800, scoped, tag = 'input window, operand 1']
    #allocation6 [shape = 's32[2]{0}', space=sflag, size = 0x8, scoped, tag = 'scoped memory for tpu_custom_call.1']
    #allocation7 [shape = 'u8[2048]{0}', space=vmem, size = 0x800, scoped, tag = 'output window, operand 0']
    %7 = vsyncpa [#allocation3], 0
    %s8 = scalar_lea.sflag [#allocation3], 1
    %9 = vsyncpa %s8, 0
    %10 = vsyncpa [#allocation6], 0
    %s11 = scalar_lea.sflag [#allocation6], 1
    %12 = vsyncpa %s11, 0
    %13 = vsyncpa [#allocation4], 0
    %s14 = scalar_lea.sflag [#allocation4], 1
    %15 = vsyncpa %s14, 0
    loop: start=0, step=1, limit=4
    $region2: #{tpu_custom_call.1} parent=1 // loop_pre_header
      _
    $region3: #{tpu_custom_call.1} parent=1 // loop_header
      %s17 = sphi 0, %s21
      %p18 = scmp.ge.s32.totalorder %s17, 4
      %s24 = sphi 0, %s36
      %s25 = sphi 0, %s32
      %s26 = sphi 0, %s24
      %s27 = sphi 0, %s25
      %s28 = sphi 0, %s26
      %s29 = sphi 0, %s27
      %s41 = sphi 0, %s43
      %s44 = sphi 0, %s41
      %s45 = sphi 0, %s44
      %s61 = sphi 0, %s45
      %s69 = sphi 0, %s71
      %s72 = sphi 0, %s69
      %s73 = sphi 0, %s72
      %s89 = sphi 0, %s73
      %s95 = sphi 0, %s97
      %s98 = sphi 0, %s95
      %s99 = sphi 0, %s98
      %s115 = sphi 0, %s99
    $region4: #{tpu_custom_call.1} parent=1 // loop_header_branch
      %20 = sbr.rel (%p18) target = $region8
    $region5: #{tpu_custom_call.1} parent=1 // loop_body
      %s22 = ssub.s32 %s17, 1
      %s23 = ssub.s32 %s17, 2
      %s30 = sadd.s32 1, %s25
      %p31 = scmp.ge.s32.totalorder %s30, 1
      %s32 = scalar_select %p31, 0, %s30
      %s33 = sadd.s32 1, %s24
      %s34 = scalar_select %p31, %s33, %s24
      %p35 = scmp.ge.s32.totalorder %s34, 2
      %s36 = scalar_select %p35, 0, %s34
      %s37 = ssub.s32 %s24, %s36
      %s38 = ssub.s32 %s25, %s32
      %s39 = sor.u32 %s37, %s38
      %p40 = scmp.eq.s32.totalorder %s39, 0
      %s42 = sadd.s32 %s41, 1
      %s43 = scalar_select %p40, %s41, %s42
      %p46 = pneg %p40
      %p47 = scmp.eq.s32.totalorder %s17, 1
      %p48 = por %p46, %p47
      %p49 = scmp.ne.s32.totalorder %s41, %s44
      %p50 = scmp.eq.s32.totalorder %s17, 0
      %p51 = por %p49, %p50
      %p52 = scmp.ne.s32.totalorder %s41, %s44
      %p53 = scmp.eq.s32.totalorder %s22, 1
      %p54 = por %p52, %p53
      %p55 = scmp.ne.s32.totalorder %s44, %s45
      %p56 = scmp.eq.s32.totalorder %s22, 0
      %p57 = por %p55, %p56
      %p58 = scmp.ne.s32.totalorder %s44, %s45
      %p59 = scmp.eq.s32.totalorder %s23, 1
      %p60 = por %p58, %p59
      %p62 = scmp.ne.s32.totalorder %s45, %s61
      %p63 = scmp.eq.s32.totalorder %s23, 0
      %p64 = por %p62, %p63
      %s65 = ssub.s32 %s24, %s36
      %s66 = ssub.s32 %s25, %s32
      %s67 = sor.u32 %s65, %s66
      %p68 = scmp.eq.s32.totalorder %s67, 0
      %s70 = sadd.s32 %s69, 1
      %s71 = scalar_select %p68, %s69, %s70
      %p74 = pneg %p68
      %p75 = scmp.eq.s32.totalorder %s17, 1
      %p76 = por %p74, %p75
      %p77 = scmp.ne.s32.totalorder %s69, %s72
      %p78 = scmp.eq.s32.totalorder %s17, 0
      %p79 = por %p77, %p78
      %p80 = scmp.ne.s32.totalorder %s69, %s72
      %p81 = scmp.eq.s32.totalorder %s22, 1
      %p82 = por %p80, %p81
      %p83 = scmp.ne.s32.totalorder %s72, %s73
      %p84 = scmp.eq.s32.totalorder %s22, 0
      %p85 = por %p83, %p84
      %p86 = scmp.ne.s32.totalorder %s72, %s73
      %p87 = scmp.eq.s32.totalorder %s23, 1
      %p88 = por %p86, %p87
      %p90 = scmp.ne.s32.totalorder %s73, %s89
      %p91 = scmp.eq.s32.totalorder %s23, 0
      %p92 = por %p90, %p91
      %s93 = ssub.s32 %s24, %s36
      %p94 = scmp.eq.s32.totalorder %s93, 0
      %s96 = sadd.s32 %s95, 1
      %s97 = scalar_select %p94, %s95, %s96
      %p100 = pneg %p94
      %p101 = scmp.eq.s32.totalorder %s17, 1
      %p102 = por %p100, %p101
      %p103 = scmp.ne.s32.totalorder %s95, %s98
      %p104 = scmp.eq.s32.totalorder %s17, 0
      %p105 = por %p103, %p104
      %p106 = scmp.ne.s32.totalorder %s95, %s98
      %p107 = scmp.eq.s32.totalorder %s22, 1
      %p108 = por %p106, %p107
      %p109 = scmp.ne.s32.totalorder %s98, %s99
      %p110 = scmp.eq.s32.totalorder %s22, 0
      %p111 = por %p109, %p110
      %p112 = scmp.ne.s32.totalorder %s98, %s99
      %p113 = scmp.eq.s32.totalorder %s23, 1
      %p114 = por %p112, %p113
      %p116 = scmp.ne.s32.totalorder %s99, %s115
      %p117 = scmp.eq.s32.totalorder %s23, 0
      %p118 = por %p116, %p117
      %p119 = scmp.le.s32.totalorder 1, %s17
      %p120 = scmp.lt.s32.totalorder %s17, 3
      %p121 = pnand %p119, %p120
      %p122 = pneg %p121
      // Predicated region
      $region9: #{tpu_custom_call.1} parent=5 // pred_check
        _
      $region10: #{tpu_custom_call.1} parent=5 // pred_check_branch
        %124 = sbr.rel (%p121) target = $region12
      $region11: #{tpu_custom_call.1} parent=5 // pred_region
        %s125 = ssub.s32 %s17, 1
      $region12: #{tpu_custom_call.1} parent=5 // pred_fallthru
        _
      %p126 = scmp.lt.s32.totalorder %s17, 2
      // Predicated region
      $region13: #{tpu_custom_call.1} parent=5 // pred_check
        %p127 = pneg %p126
      $region14: #{tpu_custom_call.1} parent=5 // pred_check_branch
        %129 = sbr.rel (%p127) target = $region16
      $region15: #{tpu_custom_call.1} parent=5 // pred_region
        // Predicated region
        $region17: #{tpu_custom_call.1} parent=15 // pred_check
          %p130 = pneg %p51
        $region18: #{tpu_custom_call.1} parent=15 // pred_check_branch
          %132 = sbr.rel (%p130) target = $region20
        $region19: #{tpu_custom_call.1} parent=15 // pred_region
          %s133 = sand.u32 %s41, 1
          %s134 = scalar_lea.sflag [#allocation3], %s133
          %s135 = sand.u32 %s41, 1
          %s136 = smul.addr %s135, 8
          %s137 = scalar_lea.vmem [#allocation2], %s136
          %s138 = smul.u32 2, %s25
          %s140 = ssub.s32 128, 128
          %141 = vsyncadd %s134, %s140
          %s142 = smul.addr %s24, 2
          %s143 = sadd.s32 %s138, %s142
          %s144 = smul.addr %s143, 64
          %s145 = scalar_lea.hbm %s0, %s144
          %s147 = sshll.u32 %s137, 4
          %s148 = int_to_ptr.vmem [resolvable:$true] %s147
          %150 = dma.hbm_to_vmem [thread:$0]  %s145, 128, %s148, %s134
        $region20: #{tpu_custom_call.1} parent=15 // pred_fallthru
          _
        // Predicated region
        $region21: #{tpu_custom_call.1} parent=15 // pred_check
          %p151 = pneg %p79
        $region22: #{tpu_custom_call.1} parent=15 // pred_check_branch
          %153 = sbr.rel (%p151) target = $region24
        $region23: #{tpu_custom_call.1} parent=15 // pred_region
          %s154 = sand.u32 %s69, 1
          %s155 = scalar_lea.sflag [#allocation6], %s154
          %s156 = sand.u32 %s69, 1
          %s157 = smul.addr %s156, 2
          %s158 = scalar_lea.vmem [#allocation5], %s157
          %s159 = smul.u32 2, %s25
          %s161 = ssub.s32 32, 32
          %162 = vsyncadd %s155, %s161
          %s163 = smul.addr %s24, 2
          %s164 = sadd.s32 %s159, %s163
          %s165 = smul.addr %s164, 16
          %s166 = scalar_lea.hbm %s1, %s165
          %s168 = sshll.u32 %s158, 4
          %s169 = int_to_ptr.vmem [resolvable:$true] %s168
          %171 = dma.hbm_to_vmem [thread:$0]  %s166, 32, %s169, %s155
        $region24: #{tpu_custom_call.1} parent=15 // pred_fallthru
          _
      $region16: #{tpu_custom_call.1} parent=5 // pred_fallthru
        _
      %p172 = scmp.le.s32.totalorder 1, %s17
      %p173 = scmp.lt.s32.totalorder %s17, 3
      %p174 = pnand %p172, %p173
      %p175 = pneg %p174
      // Predicated region
      $region25: #{tpu_custom_call.1} parent=5 // pred_check
        _
      $region26: #{tpu_custom_call.1} parent=5 // pred_check_branch
        %177 = sbr.rel (%p174) target = $region28
      $region27: #{tpu_custom_call.1} parent=5 // pred_region
        %s178 = ssub.s32 %s17, 1
        %s179 = sand.u32 %s44, 1
        %s180 = scalar_lea.sflag [#allocation3], %s179
        %s181 = sand.u32 %s44, 1
        %s182 = smul.addr %s181, 8
        %s183 = scalar_lea.vmem [#allocation2], %s182
        // Predicated region
        $region29: #{tpu_custom_call.1} parent=27 // pred_check
          %p184 = pneg %p57
        $region30: #{tpu_custom_call.1} parent=27 // pred_check_branch
          %186 = sbr.rel (%p184) target = $region32
        $region31: #{tpu_custom_call.1} parent=27 // pred_region
          %187 = dma.done %s180, 128
        $region32: #{tpu_custom_call.1} parent=27 // pred_fallthru
          _
        %s188 = sand.u32 %s72, 1
        %s189 = scalar_lea.sflag [#allocation6], %s188
        %s190 = sand.u32 %s72, 1
        %s191 = smul.addr %s190, 2
        %s192 = scalar_lea.vmem [#allocation5], %s191
        // Predicated region
        $region33: #{tpu_custom_call.1} parent=27 // pred_check
          %p193 = pneg %p85
        $region34: #{tpu_custom_call.1} parent=27 // pred_check_branch
          %195 = sbr.rel (%p193) target = $region36
        $region35: #{tpu_custom_call.1} parent=27 // pred_region
          %196 = dma.done %s189, 32
        $region36: #{tpu_custom_call.1} parent=27 // pred_fallthru
          _
        %s197 = sand.u32 %s44, 1
        %s198 = scalar_lea.sflag [#allocation3], %s197
        %s199 = sand.u32 %s44, 1
        %s200 = smul.addr %s199, 8
        %s201 = scalar_lea.vmem [#allocation2], %s200
        %p202 = pneg %p57
        %p203 = pneg %p54
        %s204 = sand.u32 %s72, 1
        %s205 = scalar_lea.sflag [#allocation6], %s204
        %s206 = sand.u32 %s72, 1
        %s207 = smul.addr %s206, 2
        %s208 = scalar_lea.vmem [#allocation5], %s207
        %p209 = pneg %p85
        %p210 = pneg %p82
        %p211 = pneg %p111
        %p212 = pneg %p108
        %s213 = sand.u32 %s98, 1
        %s214 = scalar_lea.sflag [#allocation4], %s213
        %s215 = sand.u32 %s98, 1
        %s216 = smul.addr %s215, 2
        %s217 = scalar_lea.vmem [#allocation7], %s216
        %s218 = smul.u32 2, %s27
        %s219 = smul.u32 2, %s27
        %p220 = scmp.eq.s32.totalorder %s27, 0
        // Predicated region
        $region37: #{tpu_custom_call.1} parent=27 // pred_check
          %p221 = pneg %p220
        $region38: #{tpu_custom_call.1} parent=27 // pred_check_branch
          %223 = sbr.rel (%p221) target = $region40
        $region39: #{tpu_custom_call.1} parent=27 // pred_region
          %v224 = vlaneseq
          %vm225 = vcmp.ge.s32.totalorder %v224, 0
          %vm226 = vcmp.lt.s32.totalorder %v224, 256
          %vm227 = vmand %vm225, %vm226
          %228 = vst.msk [vmem:[%s217] sm:$0x3] %vm227, 0.0
        $region40: #{tpu_custom_call.1} parent=27 // pred_fallthru
          _
        %v229 = vld [vmem:[%s183] sm:$0xff]
        %v230 = vld [vmem:[%s192] sm:$0x3]
        %v232 = vcombine.high %v229, %v229
        %vm234 = vcmask 1043456
        %v235 = vsel %vm234, %v229, -inf
        %v236 = vrot.slane %v235, 4
        %v237 = vmax.f32 %v235, %v236
        %v238 = vrot.slane %v237, 2
        %v239 = vmax.f32 %v237, %v238
        %v240 = vrot.slane %v239, 1
        %v241 = vmax.f32 %v239, %v240
        %v242 = vsel %vm234, %v232, -inf
        %v243 = vrot.slane %v242, 4
        %v244 = vmax.f32 %v242, %v243
        %v245 = vrot.slane %v244, 2
        %v246 = vmax.f32 %v244, %v245
        %v247 = vrot.slane %v246, 1
        %v248 = vmax.f32 %v246, %v247
        %v251 = vcombine.low %v241, %v248
        %v253 = vsub.f32 %v229, %v251
        %v254 = vmul.f32 %v253, 1.442695
        %v255 = vpow.pop %v254
        %v257 = vcombine.high %v255, %v255
        %v259 = vsel %vm234, %v255, 0.0
        %v260 = vrot.slane %v259, 4
        %v261 = vadd.f32 %v259, %v260
        %v262 = vrot.slane %v261, 2
        %v263 = vadd.f32 %v261, %v262
        %v264 = vrot.slane %v263, 1
        %v265 = vadd.f32 %v263, %v264
        %v266 = vsel %vm234, %v257, 0.0
        %v267 = vrot.slane %v266, 4
        %v268 = vadd.f32 %v266, %v267
        %v269 = vrot.slane %v268, 2
        %v270 = vadd.f32 %v268, %v269
        %v271 = vrot.slane %v270, 1
        %v272 = vadd.f32 %v270, %v271
        %v273 = vlog2.pop %v265
        %v274 = vmul.f32 %v273, 0.6931472
        %v275 = vlog2.pop %v272
        %v276 = vmul.f32 %v275, 0.6931472
        %v277 = vlaneseq
        %v278 = vshrl.u32 %v277, 7
        %v279 = vlaneseq
        %v280 = vshrl.u32 %v279, 7
        %v281 = vsub.s32 0, %v280
        %v282 = vrot.slane %v230, %v281
        %v283 = vlaneseq
        %v284 = vshrl.u32 %v283, 7
        %v285 = vsub.s32 1, %v284
        %v286 = vrot.slane %v230, %v285
        %vm287 = vcmp.eq.s32.totalorder %v278, %v282
        %vm288 = vcmp.eq.s32.totalorder %v278, %v286
        %v290 = vcombine.high %v253, %v253
        %v292 = vsel %vm287, %v253, 0.0
        %v293 = vsel %vm288, %v290, 0.0
        %v294 = vsel %vm234, %v292, 0.0
        %v295 = vrot.slane %v294, 4
        %v296 = vadd.f32 %v294, %v295
        %v297 = vrot.slane %v296, 2
        %v298 = vadd.f32 %v296, %v297
        %v299 = vrot.slane %v298, 1
        %v300 = vadd.f32 %v298, %v299
        %v301 = vsel %vm234, %v293, 0.0
        %v302 = vrot.slane %v301, 4
        %v303 = vadd.f32 %v301, %v302
        %v304 = vrot.slane %v303, 2
        %v305 = vadd.f32 %v303, %v304
        %v306 = vrot.slane %v305, 1
        %v307 = vadd.f32 %v305, %v306
        %v308 = vsub.f32 %v274, %v300
        %v309 = vsub.f32 %v276, %v307
        %v310 = vld [vmem:[%s217] sm:$0x3]
        %v313 = vcombine.low %v308, %v309
        %v315 = vunpack.c.l.s4 1966171168
        %v316 = vunpack.c.0.s8 %v315
        %v317 = vlaneseq
        %v318 = vshrl.u32 %v317, 7
        %v319 = vsub.s32 %v316, %v318
        %v320 = vrot.slane %v313, %v319
        %v322 = vunpack.c.l.s4 1966171168
        %v323 = vunpack.c.0.s8 %v322
        %v324 = vlaneseq
        %v325 = vshrl.u32 %v324, 7
        %v326 = vsub.s32 %v323, %v325
        %v327 = vrot.slane %v320, %v326
        %v329 = vadd.f32 %v310, %v327
        %v330 = vlaneseq
        %vm331 = vcmp.ge.s32.totalorder %v330, 0
        %vm332 = vcmp.lt.s32.totalorder %v330, 256
        %vm333 = vmand %vm331, %vm332
        %334 = vst.msk [vmem:[%s217] sm:$0x3] %vm333, %v329
        %s335 = sand.u32 %s98, 1
        %s336 = scalar_lea.sflag [#allocation4], %s335
        %s337 = sand.u32 %s98, 1
        %s338 = smul.addr %s337, 2
        %s339 = scalar_lea.vmem [#allocation7], %s338
        // Predicated region
        $region41: #{tpu_custom_call.1} parent=27 // pred_check
          %p340 = pneg %p108
        $region42: #{tpu_custom_call.1} parent=27 // pred_check_branch
          %342 = sbr.rel (%p340) target = $region44
        $region43: #{tpu_custom_call.1} parent=27 // pred_region
          %s344 = ssub.s32 32, 32
          %345 = vsyncadd %s336, %s344
          %s346 = smul.addr %s26, 2
          %s347 = smul.addr %s346, 16
          %s348 = scalar_lea.hbm %s2, %s347
          %s350 = sshll.u32 %s339, 4
          %s351 = int_to_ptr.vmem [resolvable:$true] %s350
          %353 = dma.vmem_to_hbm [thread:$0]  %s351, 32, %s348, %s336
        $region44: #{tpu_custom_call.1} parent=27 // pred_fallthru
          _
      $region28: #{tpu_custom_call.1} parent=5 // pred_fallthru
        _
      %p354 = scmp.le.s32.totalorder 2, %s17
      // Predicated region
      $region45: #{tpu_custom_call.1} parent=5 // pred_check
        %p355 = pneg %p354
      $region46: #{tpu_custom_call.1} parent=5 // pred_check_branch
        %357 = sbr.rel (%p355) target = $region48
      $region47: #{tpu_custom_call.1} parent=5 // pred_region
        %s358 = ssub.s32 %s17, 2
        // Predicated region
        $region49: #{tpu_custom_call.1} parent=47 // pred_check
          %p359 = pneg %p114
        $region50: #{tpu_custom_call.1} parent=47 // pred_check_branch
          %361 = sbr.rel (%p359) target = $region52
        $region51: #{tpu_custom_call.1} parent=47 // pred_region
          %s362 = sand.u32 %s99, 1
          %s363 = scalar_lea.sflag [#allocation4], %s362
          %s364 = sand.u32 %s99, 1
          %s365 = smul.addr %s364, 2
          %s366 = scalar_lea.vmem [#allocation7], %s365
          %367 = dma.done %s363, 32
        $region52: #{tpu_custom_call.1} parent=47 // pred_fallthru
          _
      $region48: #{tpu_custom_call.1} parent=5 // pred_fallthru
        _
    $region6: #{tpu_custom_call.1} parent=1 // loop_footer
      %s21 = sadd.s32 1, %s17
    $region7: #{tpu_custom_call.1} parent=1 // loop_footer_branch
      %16 = sbr.rel target = $region3
    $region8: #{tpu_custom_call.1} parent=1 // loop_exit
      _
    %368 = vsyncpa [#allocation3], 1
    %s369 = scalar_lea.sflag [#allocation3], 1
    %370 = vsyncpa %s369, 1
    %371 = vsyncpa [#allocation6], 1
    %s372 = scalar_lea.sflag [#allocation6], 1
    %373 = vsyncpa %s372, 1
    %374 = vsyncpa [#allocation4], 1
    %s375 = scalar_lea.sflag [#allocation4], 1
    %376 = vsyncpa %s375, 1

</llo_original>
